<compile_context>
chip_gen: v7x
topology: tpu7x:2x2x1
jax: 0.10.0
libtpu: 0.0.40
codegen_flags: <defaults>
</compile_context>

<pallas_src>
import jax
import jax.numpy as jnp
from jax import lax
from jax.experimental import pallas as pl
from jax.experimental.pallas import tpu as pltpu


def _gather_embed_kernel(ids_ref, wtab_hbm, pos_ref, out_ref, gbuf, sems):
    """One grid step = one tile of TILE_T tokens (flattened over batch*seq).

    ids_ref : (B*S,)         int32  SMEM  (scalar-prefetched token ids)
    wtab_hbm: (V, H)         f32    HBM   (memory_space=ANY, manual DMA gather)
    pos_ref : (TILE_T, H)    f32    VMEM  (positional rows for this tile)
    out_ref : (TILE_T, H)    f32    VMEM  (output tile, auto-pipelined writeback)
    gbuf    : (2, TILE_T, H) f32    VMEM scratch (double-buffered gather)
    sems    : (2, TILE_T)           DMA semaphores (one per in-flight row)
    """
    t = pl.program_id(0)
    n_tiles = pl.num_programs(0)
    tile_t = out_ref.shape[0]
    slot = t % 2

    def issue_gather(tile_idx, slot_idx):
        base = tile_idx * tile_t

        @pl.loop(0, tile_t)
        def _(j):
            row = ids_ref[base + j]                       # SMEM scalar read
            pltpu.make_async_copy(
                wtab_hbm.at[pl.ds(row, 1)],               # (1, H) HBM row
                gbuf.at[slot_idx, pl.ds(j, 1)],           # (1, H) VMEM slot
                sems.at[slot_idx, j],
            ).start()

    def wait_gather(slot_idx):
        @pl.loop(0, tile_t)
        def _(j):
            pltpu.make_async_copy(
                wtab_hbm.at[pl.ds(0, 1)],                 # shape-only for wait
                gbuf.at[slot_idx, pl.ds(j, 1)],
                sems.at[slot_idx, j],
            ).wait()

    # Prime the pipeline: fetch this (first) tile's rows.
    @pl.when(t == 0)
    def _():
        issue_gather(t, slot)

    # Prefetch the NEXT tile's rows before waiting on the current tile, so the
    # HBM reads for t+1 overlap the wait/compute/writeback of t.
    @pl.when(t + 1 < n_tiles)
    def _():
        issue_gather(t + 1, (t + 1) % 2)

    wait_gather(slot)

    # word embedding rows + positional rows (VPU add), lane-dense (TILE_T, H).
    out_ref[...] = (gbuf[slot] + pos_ref[...]).astype(out_ref.dtype)


def _pick_tile_t(seq_len):
    """Largest token-tile size that divides S (keeps positions contiguous)."""
    for cand in (256, 128, 64, 32, 16, 8):
        if seq_len % cand == 0:
            return cand
    raise ValueError(f"seq_len must be a multiple of 8, got {seq_len}")


def embedding_net_forward(ids, word_table, pos_table):
    """ids: (B, S) int; word_table: (V, H) f32; pos_table: (MAX_LEN, H) f32."""
    B, S = ids.shape
    V, H = word_table.shape
    max_len = pos_table.shape[0]
    assert S <= max_len, f"sequence length {S} exceeds positional table {max_len}"

    tile_t = _pick_tile_t(S)
    n_tokens = B * S
    n_tiles = n_tokens // tile_t
    tiles_per_seq = S // tile_t

    # Flatten to a single token axis; clamp ids so the row DMA stays in bounds.
    ids_flat = jnp.clip(ids.reshape(n_tokens).astype(jnp.int32), 0, V - 1)

    grid_spec = pltpu.PrefetchScalarGridSpec(
        num_scalar_prefetch=1,                 # ids_flat -> SMEM
        grid=(n_tiles,),
        in_specs=[
            # Word table stays in HBM; rows are gathered with manual DMA.
            pl.BlockSpec(memory_space=pl.ANY),
            # Positional table: window TILE_T rows per tile (positions repeat
            # every S tokens because tile_t divides S).
            pl.BlockSpec((tile_t, H),
                         lambda t, ids_smem: (t % tiles_per_seq, 0)),
        ],
        out_specs=pl.BlockSpec((tile_t, H), lambda t, ids_smem: (t, 0)),
        scratch_shapes=[
            pltpu.VMEM((2, tile_t, H), word_table.dtype),   # gather double-buffer
            pltpu.SemaphoreType.DMA((2, tile_t)),           # per-row DMA sems
        ],
    )

    out_flat = pl.pallas_call(
        _gather_embed_kernel,
        out_shape=jax.ShapeDtypeStruct((n_tokens, H), word_table.dtype),
        grid_spec=grid_spec,
        compiler_params=pltpu.CompilerParams(
            dimension_semantics=("arbitrary",),   # sequential: double-buffer carry
        ),
    )(ids_flat, word_table, pos_table)

    return out_flat.reshape(B, S, H)


if __name__ == "__main__":
    # Small, deterministic setup
    B, S, V, H, MAX_LEN = 2, 8, 64, 128, 32

    key = jax.random.PRNGKey(0)
    k_ids, k_word, k_pos = jax.random.split(key, 3)

    ids = jax.random.randint(k_ids, (B, S), 0, V, dtype=jnp.int32)
    word_table = jax.random.normal(k_word, (V, H), dtype=jnp.float32) * 0.02
    pos_table = jax.random.normal(k_pos, (MAX_LEN, H), dtype=jnp.float32) * 0.02

    out = embedding_net_forward(ids, word_table, pos_table)
    out = jax.block_until_ready(out)

    # Pure-JAX reference: embedding lookup + learned positional add
    ref = word_table[ids] + pos_table[:S][None, :, :]

    assert out.shape == (B, S, H), out.shape
    assert jnp.allclose(out, ref, atol=1e-5, rtol=1e-5), "mismatch vs reference"

    print("KERNEL_OK")
</pallas_src>

<mosaic_0001>
module attributes {stable_mosaic.version = 11 : i64} {
  func.func @_gather_embed_kernel(%arg0: i32, %arg1: memref<16xi32, #tpu.memory_space<smem>>, %arg2: memref<64x128xf32, #tpu.memory_space<any>>, %arg3: memref<8x128xf32, #tpu.memory_space<vmem>>, %arg4: memref<8x128xf32, #tpu.memory_space<vmem>>, %arg5: memref<2x8x128xf32, #tpu.memory_space<vmem>>, %arg6: memref<2x8x!tpu.dma_semaphore, #tpu.memory_space<semaphore_mem>>) attributes {dimension_semantics = [#tpu.dimension_semantics<arbitrary>], iteration_bounds = array<i64: 2>, scalar_prefetch = 1 : i64, scratch_operands = 2 : i64, tpu.core_type = #tpu.core_type<tc>, window_params = [{}, {transform_indices = @transform_1, window_bounds = array<i64: 8, 128>}, {transform_indices = @transform_2, window_bounds = array<i64: 8, 128>}]} {
    %c2_i32 = arith.constant 2 : i32
    %c0_i32 = arith.constant 0 : i32
    %0 = arith.cmpi eq, %c2_i32, %c0_i32 : i32
    %c1_i32 = arith.constant 1 : i32
    %1 = arith.select %0, %c1_i32, %c2_i32 : i32
    %2 = arith.remsi %arg0, %1 : i32
    %c0_i32_0 = arith.constant 0 : i32
    %3 = arith.cmpi ne, %2, %c0_i32_0 : i32
    %c0_i32_1 = arith.constant 0 : i32
    %4 = arith.cmpi slt, %2, %c0_i32_1 : i32
    %c0_i32_2 = arith.constant 0 : i32
    %5 = arith.cmpi slt, %1, %c0_i32_2 : i32
    %6 = arith.xori %4, %5 : i1
    %7 = arith.andi %6, %3 : i1
    %8 = arith.addi %2, %1 : i32
    %9 = arith.select %7, %8, %2 : i32
    %c0_i32_3 = arith.constant 0 : i32
    %10 = arith.cmpi eq, %arg0, %c0_i32_3 : i32
    %11 = arith.extui %10 : i1 to i32
    %c0_i32_4 = arith.constant 0 : i32
    %12 = arith.cmpi ne, %11, %c0_i32_4 : i32
    scf.if %12 {
      %c8_i32_16 = arith.constant 8 : i32
      %24 = arith.muli %arg0, %c8_i32_16 : i32
      %c0_i32_17 = arith.constant 0 : i32
      %c8_i32_18 = arith.constant 8 : i32
      %25 = arith.addi %c0_i32_17, %c8_i32_18 : i32
      %c1_i32_19 = arith.constant 1 : i32
      scf.for %arg7 = %c0_i32_17 to %25 step %c1_i32_19  : i32 {
        %c1_i32_21 = arith.constant 1 : i32
        %26 = arith.muli %arg7, %c1_i32_21 : i32
        %c0_i32_22 = arith.constant 0 : i32
        %27 = arith.addi %c0_i32_22, %26 : i32
        %28 = arith.addi %24, %27 : i32
        %29 = arith.index_cast %28 : i32 to index
        %30 = memref.load %arg1[%29] : memref<16xi32, #tpu.memory_space<smem>>
        %c0_i32_23 = arith.constant 0 : i32
        %31 = tpu.memref_slice %arg2[%30, %c0_i32_23] : memref<64x128xf32, #tpu.memory_space<any>> -> memref<1x128xf32, #tpu.memory_space<any>>
        %c0_i32_24 = arith.constant 0 : i32
        %32 = tpu.memref_slice %arg5[%9, %27, %c0_i32_24] : memref<2x8x128xf32, #tpu.memory_space<vmem>> -> memref<1x1x128xf32, #tpu.memory_space<vmem>>
        %33 = tpu.memref_squeeze %32 : memref<1x1x128xf32, #tpu.memory_space<vmem>> -> memref<1x128xf32, #tpu.memory_space<vmem>>
        %34 = tpu.memref_slice %arg6[%9, %27] : memref<2x8x!tpu.dma_semaphore, #tpu.memory_space<semaphore_mem>> -> memref<1x1x!tpu.dma_semaphore, #tpu.memory_space<semaphore_mem>>
        %35 = tpu.memref_squeeze %34 : memref<1x1x!tpu.dma_semaphore, #tpu.memory_space<semaphore_mem>> -> memref<!tpu.dma_semaphore, #tpu.memory_space<semaphore_mem>>
        tpu.enqueue_dma source(%31 : memref<1x128xf32, #tpu.memory_space<any>>) target(%33 : memref<1x128xf32, #tpu.memory_space<vmem>>) target_semaphore(%35 : memref<!tpu.dma_semaphore, #tpu.memory_space<semaphore_mem>>)
      }
      %c8_i32_20 = arith.constant 8 : i32
    } else {
    }
    %c1_i32_5 = arith.constant 1 : i32
    %13 = arith.addi %arg0, %c1_i32_5 : i32
    %c2_i32_6 = arith.constant 2 : i32
    %14 = arith.cmpi slt, %13, %c2_i32_6 : i32
    %15 = arith.extui %14 : i1 to i32
    %c0_i32_7 = arith.constant 0 : i32
    %16 = arith.cmpi ne, %15, %c0_i32_7 : i32
    scf.if %16 {
      %c1_i32_16 = arith.constant 1 : i32
      %24 = arith.addi %arg0, %c1_i32_16 : i32
      %c1_i32_17 = arith.constant 1 : i32
      %25 = arith.addi %arg0, %c1_i32_17 : i32
      %c2_i32_18 = arith.constant 2 : i32
      %c0_i32_19 = arith.constant 0 : i32
      %26 = arith.cmpi eq, %c2_i32_18, %c0_i32_19 : i32
      %c1_i32_20 = arith.constant 1 : i32
      %27 = arith.select %26, %c1_i32_20, %c2_i32_18 : i32
      %28 = arith.remsi %25, %27 : i32
      %c0_i32_21 = arith.constant 0 : i32
      %29 = arith.cmpi ne, %28, %c0_i32_21 : i32
      %c0_i32_22 = arith.constant 0 : i32
      %30 = arith.cmpi slt, %28, %c0_i32_22 : i32
      %c0_i32_23 = arith.constant 0 : i32
      %31 = arith.cmpi slt, %27, %c0_i32_23 : i32
      %32 = arith.xori %30, %31 : i1
      %33 = arith.andi %32, %29 : i1
      %34 = arith.addi %28, %27 : i32
      %35 = arith.select %33, %34, %28 : i32
      %c8_i32_24 = arith.constant 8 : i32
      %36 = arith.muli %24, %c8_i32_24 : i32
      %c0_i32_25 = arith.constant 0 : i32
      %c8_i32_26 = arith.constant 8 : i32
      %37 = arith.addi %c0_i32_25, %c8_i32_26 : i32
      %c1_i32_27 = arith.constant 1 : i32
      scf.for %arg7 = %c0_i32_25 to %37 step %c1_i32_27  : i32 {
        %c1_i32_29 = arith.constant 1 : i32
        %38 = arith.muli %arg7, %c1_i32_29 : i32
        %c0_i32_30 = arith.constant 0 : i32
        %39 = arith.addi %c0_i32_30, %38 : i32
        %40 = arith.addi %36, %39 : i32
        %41 = arith.index_cast %40 : i32 to index
        %42 = memref.load %arg1[%41] : memref<16xi32, #tpu.memory_space<smem>>
        %c0_i32_31 = arith.constant 0 : i32
        %43 = tpu.memref_slice %arg2[%42, %c0_i32_31] : memref<64x128xf32, #tpu.memory_space<any>> -> memref<1x128xf32, #tpu.memory_space<any>>
        %c0_i32_32 = arith.constant 0 : i32
        %44 = tpu.memref_slice %arg5[%35, %39, %c0_i32_32] : memref<2x8x128xf32, #tpu.memory_space<vmem>> -> memref<1x1x128xf32, #tpu.memory_space<vmem>>
        %45 = tpu.memref_squeeze %44 : memref<1x1x128xf32, #tpu.memory_space<vmem>> -> memref<1x128xf32, #tpu.memory_space<vmem>>
        %46 = tpu.memref_slice %arg6[%35, %39] : memref<2x8x!tpu.dma_semaphore, #tpu.memory_space<semaphore_mem>> -> memref<1x1x!tpu.dma_semaphore, #tpu.memory_space<semaphore_mem>>
        %47 = tpu.memref_squeeze %46 : memref<1x1x!tpu.dma_semaphore, #tpu.memory_space<semaphore_mem>> -> memref<!tpu.dma_semaphore, #tpu.memory_space<semaphore_mem>>
        tpu.enqueue_dma source(%43 : memref<1x128xf32, #tpu.memory_space<any>>) target(%45 : memref<1x128xf32, #tpu.memory_space<vmem>>) target_semaphore(%47 : memref<!tpu.dma_semaphore, #tpu.memory_space<semaphore_mem>>)
      }
      %c8_i32_28 = arith.constant 8 : i32
    } else {
    }
    %c0_i32_8 = arith.constant 0 : i32
    %c8_i32 = arith.constant 8 : i32
    %17 = arith.addi %c0_i32_8, %c8_i32 : i32
    %c1_i32_9 = arith.constant 1 : i32
    scf.for %arg7 = %c0_i32_8 to %17 step %c1_i32_9  : i32 {
      %c1_i32_16 = arith.constant 1 : i32
      %24 = arith.muli %arg7, %c1_i32_16 : i32
      %c0_i32_17 = arith.constant 0 : i32
      %25 = arith.addi %c0_i32_17, %24 : i32
      %c0_i32_18 = arith.constant 0 : i32
      %c0_i32_19 = arith.constant 0 : i32
      %26 = tpu.memref_slice %arg2[%c0_i32_18, %c0_i32_19] : memref<64x128xf32, #tpu.memory_space<any>> -> memref<1x128xf32, #tpu.memory_space<any>>
      %c0_i32_20 = arith.constant 0 : i32
      %27 = tpu.memref_slice %arg5[%9, %25, %c0_i32_20] : memref<2x8x128xf32, #tpu.memory_space<vmem>> -> memref<1x1x128xf32, #tpu.memory_space<vmem>>
      %28 = tpu.memref_squeeze %27 : memref<1x1x128xf32, #tpu.memory_space<vmem>> -> memref<1x128xf32, #tpu.memory_space<vmem>>
      %29 = tpu.memref_slice %arg6[%9, %25] : memref<2x8x!tpu.dma_semaphore, #tpu.memory_space<semaphore_mem>> -> memref<1x1x!tpu.dma_semaphore, #tpu.memory_space<semaphore_mem>>
      %30 = tpu.memref_squeeze %29 : memref<1x1x!tpu.dma_semaphore, #tpu.memory_space<semaphore_mem>> -> memref<!tpu.dma_semaphore, #tpu.memory_space<semaphore_mem>>
      tpu.wait_dma2 semaphore(%30 : memref<!tpu.dma_semaphore, #tpu.memory_space<semaphore_mem>>) src(%26 : memref<1x128xf32, #tpu.memory_space<any>>) dst(%28 : memref<1x128xf32, #tpu.memory_space<vmem>>)
    }
    %c8_i32_10 = arith.constant 8 : i32
    %18 = arith.index_cast %9 : i32 to index
    %c0 = arith.constant 0 : index
    %c0_11 = arith.constant 0 : index
    %19 = vector.load %arg5[%18, %c0, %c0_11] : memref<2x8x128xf32, #tpu.memory_space<vmem>>, vector<1x8x128xf32>
    %20 = vector.shape_cast %19 : vector<1x8x128xf32> to vector<8x128xf32>
    %c0_12 = arith.constant 0 : index
    %c0_13 = arith.constant 0 : index
    %21 = vector.load %arg3[%c0_12, %c0_13] : memref<8x128xf32, #tpu.memory_space<vmem>>, vector<8x128xf32>
    %22 = arith.addf %20, %21 : vector<8x128xf32>
    %c0_14 = arith.constant 0 : index
    %c0_15 = arith.constant 0 : index
    %23 = vector.load %arg4[%c0_14, %c0_15] : memref<8x128xf32, #tpu.memory_space<vmem>>, vector<8x128xf32>
    tpu.vector_store %arg4[%c0_14, %c0_15], %22 {strides = array<i32>} : memref<8x128xf32, #tpu.memory_space<vmem>>, vector<8x128xf32>,
    return
  }
  func.func @transform_1(%arg0: i32, %arg1: memref<16xi32, #tpu.memory_space<smem>>) -> (i32, i32) {
    %c1_i32 = arith.constant 1 : i32
    %c0_i32 = arith.constant 0 : i32
    %0 = arith.cmpi eq, %c1_i32, %c0_i32 : i32
    %c1_i32_0 = arith.constant 1 : i32
    %1 = arith.select %0, %c1_i32_0, %c1_i32 : i32
    %2 = arith.remsi %arg0, %1 : i32
    %c0_i32_1 = arith.constant 0 : i32
    %3 = arith.cmpi ne, %2, %c0_i32_1 : i32
    %c0_i32_2 = arith.constant 0 : i32
    %4 = arith.cmpi slt, %2, %c0_i32_2 : i32
    %c0_i32_3 = arith.constant 0 : i32
    %5 = arith.cmpi slt, %1, %c0_i32_3 : i32
    %6 = arith.xori %4, %5 : i1
    %7 = arith.andi %6, %3 : i1
    %8 = arith.addi %2, %1 : i32
    %9 = arith.select %7, %8, %2 : i32
    %c0_i32_4 = arith.constant 0 : i32
    %c0_i32_5 = arith.constant 0 : i32
    return %9, %c0_i32_4 : i32, i32
  }
  func.func @transform_2(%arg0: i32, %arg1: memref<16xi32, #tpu.memory_space<smem>>) -> (i32, i32) {
    %c0_i32 = arith.constant 0 : i32
    %c0_i32_0 = arith.constant 0 : i32
    return %arg0, %c0_i32 : i32, i32
  }
}

</mosaic_0001>

<llo_original>
// kernel: tpu_custom_call.1
$region0: #{tpu_custom_call.1}
  #allocation0 [shape = 'u32[]', space=smem, size = 0x4, offset = 0x4, fixed_abs, tag = 'smem constant byte address 0x4 - core index']
  #allocation1 [shape = 'u32[144,128]{1,0:T(1,128)}', space=vmem, size = 0x12000, scoped, tag = 'internal scratch']
  #allocation2 [shape = 'f32[2,8,128]{2,1,0:T(8,128)}', space=vmem, size = 0x2000, scoped, tag = 'scratch operand']
  #allocation3 [shape = 's32[16]{0}', space=sflag, size = 0x40, scoped, tag = 'scratch operand']
  #allocation4 [shape = 's32[1]{0}', space=sflag, size = 0x4, scoped, tag = 'scoped memory for tpu_custom_call.1']
  #allocation5 [shape = 'u8[512]{0}', space=smem, size = 0x200, scoped, tag = 'prefetched SMEM operand 0']
  #allocation10 [shape = 's32[]', space=sflag, size = 0x4, offset = 0, fixed_abs, tag = 'sflag constant byte address 0x0 - dummy sync flag']
  #allocation11 [shape = 's32[]', space=sflag, size = 0x4, offset = 0, fixed_abs, tag = 'sflag constant byte address 0x0 - dummy sync flag']
  #allocation12 [shape = 'u32[]', space=smem, size = 0x4, offset = 0x44, fixed_abs, tag = 'smem constant byte address 0x44 - assertion arg 0']
  #allocation13 [shape = 'u32[]', space=smem, size = 0x4, offset = 0x48, fixed_abs, tag = 'smem constant byte address 0x48 - assertion arg 1']
  #allocation14 [shape = 's32[]', space=sflag, size = 0x4, offset = 0, fixed_abs, tag = 'sflag constant byte address 0x0 - dummy sync flag']
  #allocation15 [shape = 's32[]', space=sflag, size = 0x4, offset = 0, fixed_abs, tag = 'sflag constant byte address 0x0 - dummy sync flag']
  %s0 = inlined_call_operand.hbm [shape: s32[16], index: 0, kind: input, shape index: {}]
  %s1 = inlined_call_operand.hbm [shape: f32[64,128], index: 1, kind: input, shape index: {}]
  %s2 = inlined_call_operand.hbm [shape: f32[32,128], index: 2, kind: input, shape index: {}]
  %s3 = inlined_call_operand.hbm [shape: f32[16,128], index: 3, kind: output, shape index: {}]
  %s4 = sld [smem:[#allocation0]]
  $region78: #{tpu_custom_call.1} parent=0
    _
  %s6 = ssub.s32 1, %s4
  %s7 = scalar_select 0, %s6, %s4
  %9 = dma.hbm_to_smem %s0, 16, [#allocation5], [#allocation4]
  %10 = dma.done [#allocation4], 16
  %11 = sfence
  $region1: #{tpu_custom_call.1} parent=0
    #allocation6 [shape = 'u8[4096]{0}', space=vmem, size = 0x1000, scoped, tag = 'input window, operand 2, single buffered']
    #allocation7 [shape = 's32[2]{0}', space=sflag, size = 0x8, scoped, tag = 'scoped memory for tpu_custom_call.1']
    #allocation8 [shape = 's32[2]{0}', space=sflag, size = 0x8, scoped, tag = 'scoped memory for tpu_custom_call.1']
    #allocation9 [shape = 'u8[8192]{0}', space=vmem, size = 0x2000, scoped, tag = 'output window, operand 0']
    %12 = vsyncpa [#allocation7], 0
    %13 = vsyncpa [#allocation8], 0
    %s14 = scalar_lea.sflag [#allocation8], 1
    %15 = vsyncpa %s14, 0
    loop: start=0, step=1, limit=4
    $region2: #{tpu_custom_call.1} parent=1 // loop_pre_header
      _
    $region3: #{tpu_custom_call.1} parent=1 // loop_header
      %s17 = sphi 0, %s21
      %p18 = scmp.ge.s32.totalorder %s17, 4
      %s25 = sphi 0, %s25
      %s27 = sphi 0, %s25
      %s28 = sphi 0, %s27
      %s42 = sphi 0, %s28
      %s48 = sphi 0, %s50
      %s51 = sphi 0, %s48
      %s52 = sphi 0, %s51
      %s68 = sphi 0, %s52
    $region4: #{tpu_custom_call.1} parent=1 // loop_header_branch
      %20 = sbr.rel (%p18) target = $region8
    $region5: #{tpu_custom_call.1} parent=1 // loop_body
      %s22 = ssub.s32 %s17, 1
      %s23 = ssub.s32 %s17, 2
      %s24 = sadd.s32 %s17, 1
      %s26 = sadd.s32 %s25, 1
      %p29 = scmp.eq.s32.totalorder %s17, 1
      %p30 = scmp.ne.s32.totalorder %s25, %s27
      %p31 = scmp.eq.s32.totalorder %s17, 0
      %p32 = por %p30, %p31
      %p33 = scmp.ne.s32.totalorder %s25, %s27
      %p34 = scmp.eq.s32.totalorder %s22, 1
      %p35 = por %p33, %p34
      %p36 = scmp.ne.s32.totalorder %s27, %s28
      %p37 = scmp.eq.s32.totalorder %s22, 0
      %p38 = por %p36, %p37
      %p39 = scmp.ne.s32.totalorder %s27, %s28
      %p40 = scmp.eq.s32.totalorder %s23, 1
      %p41 = por %p39, %p40
      %p43 = scmp.ne.s32.totalorder %s28, %s42
      %p44 = scmp.eq.s32.totalorder %s23, 0
      %p45 = por %p43, %p44
      %s46 = ssub.s32 %s17, %s24
      %p47 = scmp.eq.s32.totalorder %s46, 0
      %s49 = sadd.s32 %s48, 1
      %s50 = scalar_select %p47, %s48, %s49
      %p53 = pneg %p47
      %p54 = scmp.eq.s32.totalorder %s17, 1
      %p55 = por %p53, %p54
      %p56 = scmp.ne.s32.totalorder %s48, %s51
      %p57 = scmp.eq.s32.totalorder %s17, 0
      %p58 = por %p56, %p57
      %p59 = scmp.ne.s32.totalorder %s48, %s51
      %p60 = scmp.eq.s32.totalorder %s22, 1
      %p61 = por %p59, %p60
      %p62 = scmp.ne.s32.totalorder %s51, %s52
      %p63 = scmp.eq.s32.totalorder %s22, 0
      %p64 = por %p62, %p63
      %p65 = scmp.ne.s32.totalorder %s51, %s52
      %p66 = scmp.eq.s32.totalorder %s23, 1
      %p67 = por %p65, %p66
      %p69 = scmp.ne.s32.totalorder %s52, %s68
      %p70 = scmp.eq.s32.totalorder %s23, 0
      %p71 = por %p69, %p70
      %p72 = scmp.le.s32.totalorder 1, %s17
      %p73 = scmp.lt.s32.totalorder %s17, 3
      %p74 = pnand %p72, %p73
      %p75 = pneg %p74
      // Predicated region
      $region9: #{tpu_custom_call.1} parent=5 // pred_check
        _
      $region10: #{tpu_custom_call.1} parent=5 // pred_check_branch
        %77 = sbr.rel (%p74) target = $region12
      $region11: #{tpu_custom_call.1} parent=5 // pred_region
        %s78 = ssub.s32 %s17, 1
        // Predicated region
        $region13: #{tpu_custom_call.1} parent=11 // pred_check
          %p79 = pneg %p38
        $region14: #{tpu_custom_call.1} parent=11 // pred_check_branch
          %81 = sbr.rel (%p79) target = $region16
        $region15: #{tpu_custom_call.1} parent=11 // pred_region
          %s83 = ssub.s32 128, 128
          %84 = vsyncadd [#allocation7], %s83
          %s86 = sshll.u32 [#allocation6], 4
          %s87 = int_to_ptr.vmem [resolvable:$true] %s86
          %89 = dma.hbm_to_vmem [thread:$0]  %s2, 128, %s87, [#allocation7]
        $region16: #{tpu_custom_call.1} parent=11 // pred_fallthru
          _
      $region12: #{tpu_custom_call.1} parent=5 // pred_fallthru
        _
      %p90 = scmp.lt.s32.totalorder %s17, 2
      // Predicated region
      $region17: #{tpu_custom_call.1} parent=5 // pred_check
        %p91 = pneg %p90
      $region18: #{tpu_custom_call.1} parent=5 // pred_check_branch
        %93 = sbr.rel (%p91) target = $region20
      $region19: #{tpu_custom_call.1} parent=5 // pred_region
        _
      $region20: #{tpu_custom_call.1} parent=5 // pred_fallthru
        _
      %p94 = scmp.le.s32.totalorder 1, %s17
      %p95 = scmp.lt.s32.totalorder %s17, 3
      %p96 = pnand %p94, %p95
      %p97 = pneg %p96
      // Predicated region
      $region21: #{tpu_custom_call.1} parent=5 // pred_check
        _
      $region22: #{tpu_custom_call.1} parent=5 // pred_check_branch
        %99 = sbr.rel (%p96) target = $region24
      $region23: #{tpu_custom_call.1} parent=5 // pred_region
        %s100 = ssub.s32 %s17, 1
        // Predicated region
        $region25: #{tpu_custom_call.1} parent=23 // pred_check
          %p101 = pneg %p38
        $region26: #{tpu_custom_call.1} parent=23 // pred_check_branch
          %103 = sbr.rel (%p101) target = $region28
        $region27: #{tpu_custom_call.1} parent=23 // pred_region
          %104 = dma.done [#allocation7], 128
        $region28: #{tpu_custom_call.1} parent=23 // pred_fallthru
          _
        %p105 = pneg %p38
        %p106 = pneg %p35
        %p107 = pneg %p64
        %p108 = pneg %p61
        %s109 = sand.u32 %s51, 1
        %s110 = scalar_lea.sflag [#allocation8], %s109
        %s111 = sand.u32 %s51, 1
        %s112 = smul.addr %s111, 8
        %s113 = scalar_lea.vmem [#allocation9], %s112
        %p114 = scmp.lt.s32.totalorder %s22, 0
        %s115 = ssub.s32 0, %s22
        %s116 = scalar_select %p114, %s115, %s22
        %s117 = sand.u32 %s116, 1
        %s118 = ssub.s32 0, %s117
        %s119 = scalar_select %p114, %s118, %s117
        %p120 = scmp.ne.s32.totalorder %s119, 0
        %p121 = scmp.lt.s32.totalorder %s119, 0
        %p122 = pnand %p121, %p120
        %p123 = pneg %p122
        %s124 = sadd.s32 %s119, 2
        %s125 = scalar_select %p123, %s124, %s119
        %p126 = scmp.eq.s32.totalorder %s22, 0
        // Predicated region
        $region29: #{tpu_custom_call.1} parent=23 // pred_check
          %p127 = pneg %p126
        $region30: #{tpu_custom_call.1} parent=23 // pred_check_branch
          %129 = sbr.rel (%p127) target = $region32
        $region31: #{tpu_custom_call.1} parent=23 // pred_region
          %s130 = smul.u32 %s22, 8
          loop: start=0, step=1, limit=8
          $region33: #{tpu_custom_call.1} parent=31 // loop_pre_header
            _
          $region34: #{tpu_custom_call.1} parent=31 // loop_header
            %s132 = sphi 0, %s136
            %p133 = scmp.ge.s32.totalorder %s132, 8
          $region35: #{tpu_custom_call.1} parent=31 // loop_header_branch
            %135 = sbr.rel (%p133) target = $region39
          $region36: #{tpu_custom_call.1} parent=31 // loop_body
            %s137 = sadd.s32 %s130, %s132
            %s138 = sld [smem:[#allocation5 + %s137]]
            %s139 = smul.addr %s138, 16
            %s140 = scalar_lea.hbm %s1, %s139
            %s141 = smul.u32 %s125, 8
            %s142 = sadd.s32 %s132, %s141
            %s143 = scalar_lea.vmem [#allocation2], %s142
            %s144 = scalar_lea.sflag [#allocation3], %s142
            // Predicated region
            $region40: #{tpu_custom_call.1} parent=36 // pred_check
              _
            $region41: #{tpu_custom_call.1} parent=36 // pred_check_branch
              %146 = sbr.rel target = $region43
            $region42: #{tpu_custom_call.1} parent=36 // pred_region
              %147 = sst [smem:[#allocation12]] [#allocation11]
              %148 = sst [smem:[#allocation13]] [#allocation10]
            $region43: #{tpu_custom_call.1} parent=36 // pred_fallthru
              _
            %150 = shalt.err (0)
            %s152 = sshll.u32 %s143, 4
            %s153 = int_to_ptr.vmem [resolvable:$true] %s152
            %155 = dma.hbm_to_vmem [thread:$0]  %s140, 16, %s153, %s144
          $region37: #{tpu_custom_call.1} parent=31 // loop_footer
            %s136 = sadd.s32 1, %s132
          $region38: #{tpu_custom_call.1} parent=31 // loop_footer_branch
            %131 = sbr.rel target = $region34
          $region39: #{tpu_custom_call.1} parent=31 // loop_exit
            _
        $region32: #{tpu_custom_call.1} parent=23 // pred_fallthru
          _
        %s156 = sadd.s32 %s22, 1
        %p157 = scmp.lt.s32.totalorder %s156, 2
        // Predicated region
        $region44: #{tpu_custom_call.1} parent=23 // pred_check
          %p158 = pneg %p157
        $region45: #{tpu_custom_call.1} parent=23 // pred_check_branch
          %160 = sbr.rel (%p158) target = $region47
        $region46: #{tpu_custom_call.1} parent=23 // pred_region
          %p161 = scmp.lt.s32.totalorder %s156, 0
          %s162 = ssub.s32 0, %s156
          %s163 = scalar_select %p161, %s162, %s156
          %s164 = sand.u32 %s163, 1
          %s165 = ssub.s32 0, %s164
          %s166 = scalar_select %p161, %s165, %s164
          %p167 = scmp.ne.s32.totalorder %s166, 0
          %p168 = scmp.lt.s32.totalorder %s166, 0
          %p169 = pnand %p168, %p167
          %p170 = pneg %p169
          %s171 = sadd.s32 %s166, 2
          %s172 = scalar_select %p170, %s171, %s166
          %s173 = smul.u32 %s156, 8
          loop: start=0, step=1, limit=8
          $region48: #{tpu_custom_call.1} parent=46 // loop_pre_header
            _
          $region49: #{tpu_custom_call.1} parent=46 // loop_header
            %s175 = sphi 0, %s179
            %p176 = scmp.ge.s32.totalorder %s175, 8
          $region50: #{tpu_custom_call.1} parent=46 // loop_header_branch
            %178 = sbr.rel (%p176) target = $region54
          $region51: #{tpu_custom_call.1} parent=46 // loop_body
            %s180 = sadd.s32 %s173, %s175
            %s181 = sld [smem:[#allocation5 + %s180]]
            %s182 = smul.addr %s181, 16
            %s183 = scalar_lea.hbm %s1, %s182
            %s184 = smul.u32 %s172, 8
            %s185 = sadd.s32 %s175, %s184
            %s186 = scalar_lea.vmem [#allocation2], %s185
            %s187 = scalar_lea.sflag [#allocation3], %s185
            // Predicated region
            $region55: #{tpu_custom_call.1} parent=51 // pred_check
              _
            $region56: #{tpu_custom_call.1} parent=51 // pred_check_branch
              %189 = sbr.rel target = $region58
            $region57: #{tpu_custom_call.1} parent=51 // pred_region
              %190 = sst [smem:[#allocation12]] [#allocation15]
              %191 = sst [smem:[#allocation13]] [#allocation14]
            $region58: #{tpu_custom_call.1} parent=51 // pred_fallthru
              _
            %193 = shalt.err (0)
            %s195 = sshll.u32 %s186, 4
            %s196 = int_to_ptr.vmem [resolvable:$true] %s195
            %198 = dma.hbm_to_vmem [thread:$0]  %s183, 16, %s196, %s187
          $region52: #{tpu_custom_call.1} parent=46 // loop_footer
            %s179 = sadd.s32 1, %s175
          $region53: #{tpu_custom_call.1} parent=46 // loop_footer_branch
            %174 = sbr.rel target = $region49
          $region54: #{tpu_custom_call.1} parent=46 // loop_exit
            _
        $region47: #{tpu_custom_call.1} parent=23 // pred_fallthru
          _
        loop: start=0, step=1, limit=8
        $region59: #{tpu_custom_call.1} parent=23 // loop_pre_header
          _
        $region60: #{tpu_custom_call.1} parent=23 // loop_header
          %s200 = sphi 0, %s204
          %p201 = scmp.ge.s32.totalorder %s200, 8
        $region61: #{tpu_custom_call.1} parent=23 // loop_header_branch
          %203 = sbr.rel (%p201) target = $region65
        $region62: #{tpu_custom_call.1} parent=23 // loop_body
          %s205 = smul.u32 %s125, 8
          %s206 = sadd.s32 %s200, %s205
          %s207 = scalar_lea.sflag [#allocation3], %s206
          %s208 = smul.u32 1, 1
          %s209 = sshll.u32 %s208, 4
          %210 = dma.done %s207, %s209
        $region63: #{tpu_custom_call.1} parent=23 // loop_footer
          %s204 = sadd.s32 1, %s200
        $region64: #{tpu_custom_call.1} parent=23 // loop_footer_branch
          %199 = sbr.rel target = $region60
        $region65: #{tpu_custom_call.1} parent=23 // loop_exit
          _
        %s211 = smul.u32 %s125, 8
        %s212 = scalar_lea.vmem [#allocation2], %s211
        %v213 = vld [vmem:[%s212] sm:$0xff]
        %v214 = vld [vmem:[#allocation6] sm:$0xff]
        %v215 = vadd.f32 %v213, %v214
        %216 = vst [vmem:[%s113] sm:$0xff] %v215
        %s217 = sand.u32 %s51, 1
        %s218 = scalar_lea.sflag [#allocation8], %s217
        %s219 = sand.u32 %s51, 1
        %s220 = smul.addr %s219, 8
        %s221 = scalar_lea.vmem [#allocation9], %s220
        // Predicated region
        $region66: #{tpu_custom_call.1} parent=23 // pred_check
          %p222 = pneg %p61
        $region67: #{tpu_custom_call.1} parent=23 // pred_check_branch
          %224 = sbr.rel (%p222) target = $region69
        $region68: #{tpu_custom_call.1} parent=23 // pred_region
          %s226 = ssub.s32 128, 128
          %227 = vsyncadd %s218, %s226
          %s228 = smul.addr %s22, 128
          %s229 = scalar_lea.hbm %s3, %s228
          %s231 = sshll.u32 %s221, 4
          %s232 = int_to_ptr.vmem [resolvable:$true] %s231
          %234 = dma.vmem_to_hbm [thread:$0]  %s232, 128, %s229, %s218
        $region69: #{tpu_custom_call.1} parent=23 // pred_fallthru
          _
      $region24: #{tpu_custom_call.1} parent=5 // pred_fallthru
        _
      %p235 = scmp.le.s32.totalorder 2, %s17
      // Predicated region
      $region70: #{tpu_custom_call.1} parent=5 // pred_check
        %p236 = pneg %p235
      $region71: #{tpu_custom_call.1} parent=5 // pred_check_branch
        %238 = sbr.rel (%p236) target = $region73
      $region72: #{tpu_custom_call.1} parent=5 // pred_region
        %s239 = ssub.s32 %s17, 2
        // Predicated region
        $region74: #{tpu_custom_call.1} parent=72 // pred_check
          %p240 = pneg %p67
        $region75: #{tpu_custom_call.1} parent=72 // pred_check_branch
          %242 = sbr.rel (%p240) target = $region77
        $region76: #{tpu_custom_call.1} parent=72 // pred_region
          %s243 = sand.u32 %s52, 1
          %s244 = scalar_lea.sflag [#allocation8], %s243
          %s245 = sand.u32 %s52, 1
          %s246 = smul.addr %s245, 8
          %s247 = scalar_lea.vmem [#allocation9], %s246
          %248 = dma.done %s244, 128
        $region77: #{tpu_custom_call.1} parent=72 // pred_fallthru
          _
      $region73: #{tpu_custom_call.1} parent=5 // pred_fallthru
        _
    $region6: #{tpu_custom_call.1} parent=1 // loop_footer
      %s21 = sadd.s32 1, %s17
    $region7: #{tpu_custom_call.1} parent=1 // loop_footer_branch
      %16 = sbr.rel target = $region3
    $region8: #{tpu_custom_call.1} parent=1 // loop_exit
      _
    %249 = vsyncpa [#allocation7], 1
    %s250 = scalar_lea.sflag [#allocation7], 1
    %251 = vsyncpa %s250, 1
    %252 = vsyncpa [#allocation8], 1
    %s253 = scalar_lea.sflag [#allocation8], 1
    %254 = vsyncpa %s253, 1
  %255 = vsyncmov [#allocation3]
  %s256 = vpop.sfrf %255
  %p257 = scmp.eq.s32.totalorder %s256, 0
  %p258 = pneg %p257
  %260 = shalt.err (%p258)
  %s261 = scalar_lea.sflag [#allocation3], 1
  %262 = vsyncmov %s261
  %s263 = vpop.sfrf %262
  %p264 = scmp.eq.s32.totalorder %s263, 0
  %p265 = pneg %p264
  %267 = shalt.err (%p265)
  %s268 = scalar_lea.sflag [#allocation3], 2
  %269 = vsyncmov %s268
  %s270 = vpop.sfrf %269
  %p271 = scmp.eq.s32.totalorder %s270, 0
  %p272 = pneg %p271
  %274 = shalt.err (%p272)
  %s275 = scalar_lea.sflag [#allocation3], 3
  %276 = vsyncmov %s275
  %s277 = vpop.sfrf %276
  %p278 = scmp.eq.s32.totalorder %s277, 0
  %p279 = pneg %p278
  %281 = shalt.err (%p279)
  %s282 = scalar_lea.sflag [#allocation3], 4
  %283 = vsyncmov %s282
  %s284 = vpop.sfrf %283
  %p285 = scmp.eq.s32.totalorder %s284, 0
  %p286 = pneg %p285
  %288 = shalt.err (%p286)
  %s289 = scalar_lea.sflag [#allocation3], 5
  %290 = vsyncmov %s289
  %s291 = vpop.sfrf %290
  %p292 = scmp.eq.s32.totalorder %s291, 0
  %p293 = pneg %p292
  %295 = shalt.err (%p293)
  %s296 = scalar_lea.sflag [#allocation3], 6
  %297 = vsyncmov %s296
  %s298 = vpop.sfrf %297
  %p299 = scmp.eq.s32.totalorder %s298, 0
  %p300 = pneg %p299
  %302 = shalt.err (%p300)
  %s303 = scalar_lea.sflag [#allocation3], 7
  %304 = vsyncmov %s303
  %s305 = vpop.sfrf %304
  %p306 = scmp.eq.s32.totalorder %s305, 0
  %p307 = pneg %p306
  %309 = shalt.err (%p307)
  %s310 = scalar_lea.sflag [#allocation3], 8
  %311 = vsyncmov %s310
  %s312 = vpop.sfrf %311
  %p313 = scmp.eq.s32.totalorder %s312, 0
  %p314 = pneg %p313
  %316 = shalt.err (%p314)
  %s317 = scalar_lea.sflag [#allocation3], 9
  %318 = vsyncmov %s317
  %s319 = vpop.sfrf %318
  %p320 = scmp.eq.s32.totalorder %s319, 0
  %p321 = pneg %p320
  %323 = shalt.err (%p321)
  %s324 = scalar_lea.sflag [#allocation3], 10
  %325 = vsyncmov %s324
  %s326 = vpop.sfrf %325
  %p327 = scmp.eq.s32.totalorder %s326, 0
  %p328 = pneg %p327
  %330 = shalt.err (%p328)
  %s331 = scalar_lea.sflag [#allocation3], 11
  %332 = vsyncmov %s331
  %s333 = vpop.sfrf %332
  %p334 = scmp.eq.s32.totalorder %s333, 0
  %p335 = pneg %p334
  %337 = shalt.err (%p335)
  %s338 = scalar_lea.sflag [#allocation3], 12
  %339 = vsyncmov %s338
  %s340 = vpop.sfrf %339
  %p341 = scmp.eq.s32.totalorder %s340, 0
  %p342 = pneg %p341
  %344 = shalt.err (%p342)
  %s345 = scalar_lea.sflag [#allocation3], 13
  %346 = vsyncmov %s345
  %s347 = vpop.sfrf %346
  %p348 = scmp.eq.s32.totalorder %s347, 0
  %p349 = pneg %p348
  %351 = shalt.err (%p349)
  %s352 = scalar_lea.sflag [#allocation3], 14
  %353 = vsyncmov %s352
  %s354 = vpop.sfrf %353
  %p355 = scmp.eq.s32.totalorder %s354, 0
  %p356 = pneg %p355
  %358 = shalt.err (%p356)
  %s359 = scalar_lea.sflag [#allocation3], 15
  %360 = vsyncmov %s359
  %s361 = vpop.sfrf %360
  %p362 = scmp.eq.s32.totalorder %s361, 0
  %p363 = pneg %p362
  %365 = shalt.err (%p363)

</llo_original>
